<compile_context>
chip_gen: v7x
topology: tpu7x:2x2x1
jax: 0.10.0
libtpu: 0.0.40
codegen_flags: <defaults>
</compile_context>

<pallas_src>
import math

import jax
import jax.numpy as jnp
from jax.experimental import pallas as pl
from jax.experimental.pallas import tpu as pltpu


def _siamese_emb_kernel(x1_ref, x2_ref, w1_ref, b1_ref, w2_ref, b2_ref,
                        o1_ref, o2_ref, acc1_ref, acc2_ref):
    # x1_ref, x2_ref : [B, tk] f32   (the two siamese branches, current K tile)
    # w1_ref         : [tk, H] bf16  (shared layer-1 weight tile, streamed)
    # b1_ref         : [1, H]  f32
    # w2_ref         : [H, E]  f32   (shared layer-2 weight, resident every step)
    # b2_ref         : [1, E]  f32
    # o1_ref, o2_ref : [B, E]  f32   (one output per branch)
    # acc1_ref/acc2_ref : [B, H] f32 VMEM accumulators (persist across the K grid)
    k = pl.program_id(0)

    @pl.when(k == 0)
    def _init():
        acc1_ref[...] = jnp.zeros_like(acc1_ref)
        acc2_ref[...] = jnp.zeros_like(acc2_ref)

    # One weight-tile load, two MXU passes: this IS the weight sharing of SiameseNet.
    w1_tile = w1_ref[...]
    acc1_ref[...] += jnp.dot(x1_ref[...].astype(jnp.bfloat16), w1_tile,
                             preferred_element_type=jnp.float32)
    acc2_ref[...] += jnp.dot(x2_ref[...].astype(jnp.bfloat16), w1_tile,
                             preferred_element_type=jnp.float32)

    @pl.when(k == pl.num_programs(0) - 1)
    def _finalize():
        b1 = b1_ref[...]
        w2 = w2_ref[...]
        b2 = b2_ref[...]
        # Bias + ReLU on the VPU, tiny second matmul kept in f32 (essentially free).
        h1 = jnp.maximum(acc1_ref[...] + b1, 0.0)
        h2 = jnp.maximum(acc2_ref[...] + b1, 0.0)
        o1_ref[...] = (jnp.dot(h1, w2, preferred_element_type=jnp.float32)
                       + b2).astype(o1_ref.dtype)
        o2_ref[...] = (jnp.dot(h2, w2, preferred_element_type=jnp.float32)
                       + b2).astype(o2_ref.dtype)


def siamese_forward(x1, x2, w1_bf16, b1, w2, b2, *, tk=None):
    """Apply the shared embedding net to both inputs. Returns (out1, out2).

    w1_bf16 must already be bf16 (cast once at init, never per call).
    """
    B = x1.shape[0]
    D = math.prod(x1.shape[1:])
    Hdim = w1_bf16.shape[1]
    E = w2.shape[1]

    # Row-major NCHW flatten == torch .view(B, -1); free for contiguous inputs.
    x1f = x1.reshape(B, D)
    x2f = x2.reshape(B, D)

    # K tile: multiple of 128 lanes; for realistic D pick ~8192 so each bf16 w1 tile
    # moves ~2 MiB per grid step (>> the ~0.35 us per-step overhead).
    if tk is None:
        tk = D if D <= 8192 else 8192
    assert D % tk == 0, "D must be a multiple of the K tile (pad D if needed)"
    assert tk == D or tk % 128 == 0
    kt = D // tk

    # Explicit VMEM budget: double-buffered x/w1 tiles + resident w2/b/accs/outputs.
    vmem_bytes = (
        2 * 2 * (B * tk * 4)          # x1 + x2 tiles, double-buffered, f32
        + 2 * (tk * Hdim * 2)         # w1 tile, double-buffered, bf16
        + Hdim * E * 4 + Hdim * 4 + E * 4   # w2, b1, b2 (resident)
        + 2 * (B * Hdim * 4)          # f32 accumulators
        + 2 * 2 * (B * E * 4)         # outputs
    )
    vmem_limit = max(2 * vmem_bytes, 4 << 20)   # 2x headroom, 4 MiB floor

    out1, out2 = pl.pallas_call(
        _siamese_emb_kernel,
        out_shape=(jax.ShapeDtypeStruct((B, E), jnp.float32),
                   jax.ShapeDtypeStruct((B, E), jnp.float32)),
        grid_spec=pltpu.PrefetchScalarGridSpec(
            num_scalar_prefetch=0,
            grid=(kt,),
            in_specs=[
                pl.BlockSpec((B, tk), lambda k: (0, k)),       # x1 K-tile
                pl.BlockSpec((B, tk), lambda k: (0, k)),       # x2 K-tile
                pl.BlockSpec((tk, Hdim), lambda k: (k, 0)),    # w1 K-tile (bf16 stream)
                pl.BlockSpec((1, Hdim), lambda k: (0, 0)),     # b1 (resident)
                pl.BlockSpec((Hdim, E), lambda k: (0, 0)),     # w2 (resident)
                pl.BlockSpec((1, E), lambda k: (0, 0)),        # b2 (resident)
            ],
            out_specs=(
                pl.BlockSpec((B, E), lambda k: (0, 0)),
                pl.BlockSpec((B, E), lambda k: (0, 0)),
            ),
            scratch_shapes=[
                pltpu.VMEM((B, Hdim), jnp.float32),   # acc branch 1
                pltpu.VMEM((B, Hdim), jnp.float32),   # acc branch 2
            ],
        ),
        compiler_params=pltpu.CompilerParams(
            dimension_semantics=("arbitrary",),       # K reduction axis; single-TC
            vmem_limit_bytes=int(vmem_limit),
        ),
    )(x1f, x2f, w1_bf16, b1, w2, b2)

    return out1, out2


def init_params(key, D, Hdim, E):
    """torch.nn.Linear-style init; w1 persisted as bf16 (cast exactly once here)."""
    k1, k2, k3, k4 = jax.random.split(key, 4)
    lim1 = 1.0 / jnp.sqrt(D)
    lim2 = 1.0 / jnp.sqrt(Hdim)
    w1 = jax.random.uniform(k1, (D, Hdim), jnp.float32, -lim1, lim1)
    b1 = jax.random.uniform(k2, (1, Hdim), jnp.float32, -lim1, lim1)
    w2 = jax.random.uniform(k3, (Hdim, E), jnp.float32, -lim2, lim2)
    b2 = jax.random.uniform(k4, (1, E), jnp.float32, -lim2, lim2)
    # TODO(synk): on v5e/v6e an int8 weight path would halve the w1 stream again.
    return w1.astype(jnp.bfloat16), b1, w2, b2


if __name__ == "__main__":
    # Small shapes consistent with the forward: a pair of NCHW images.
    B, C, H, W = 2, 4, 16, 16
    D = C * H * W            # 1024
    Hdim, E = 128, 32        # embedding-net hidden / output widths

    key = jax.random.PRNGKey(0)
    kx1, kx2, kp = jax.random.split(key, 3)
    x1 = jax.random.normal(kx1, (B, C, H, W), jnp.float32)
    x2 = jax.random.normal(kx2, (B, C, H, W), jnp.float32)
    w1_bf16, b1, w2, b2 = init_params(kp, D, Hdim, E)

    # tk=256 -> 4 K-grid steps at the toy shape (exercises the pipelined weight stream).
    out1, out2 = siamese_forward(x1, x2, w1_bf16, b1, w2, b2, tk=256)
    jax.block_until_ready((out1, out2))

    # Reference in plain JAX using the SAME (bf16-valued) shared weights for both
    # branches; tolerance covers the bf16 input cast feeding the MXU on layer 1.
    w1_ref = w1_bf16.astype(jnp.float32)

    def ref_emb(x):
        h = jnp.maximum(x.reshape(B, D) @ w1_ref + b1, 0.0)
        return h @ w2 + b2

    r1, r2 = ref_emb(x1), ref_emb(x2)
    assert out1.shape == (B, E) and out2.shape == (B, E)
    assert jnp.allclose(out1, r1, atol=3e-2, rtol=3e-2)
    assert jnp.allclose(out2, r2, atol=3e-2, rtol=3e-2)

    print("KERNEL_OK")
</pallas_src>

<mosaic_0001>
module attributes {stable_mosaic.version = 11 : i64} {
  func.func @_siamese_emb_kernel(%arg0: i32, %arg1: memref<2x256xf32, #tpu.memory_space<vmem>>, %arg2: memref<2x256xf32, #tpu.memory_space<vmem>>, %arg3: memref<256x128xbf16, #tpu.memory_space<vmem>>, %arg4: memref<1x128xf32, #tpu.memory_space<vmem>>, %arg5: memref<128x32xf32, #tpu.memory_space<vmem>>, %arg6: memref<1x32xf32, #tpu.memory_space<vmem>>, %arg7: memref<2x32xf32, #tpu.memory_space<vmem>>, %arg8: memref<2x32xf32, #tpu.memory_space<vmem>>, %arg9: memref<2x128xf32, #tpu.memory_space<vmem>>, %arg10: memref<2x128xf32, #tpu.memory_space<vmem>>) attributes {dimension_semantics = [#tpu.dimension_semantics<arbitrary>], iteration_bounds = array<i64: 4>, scalar_prefetch = 0 : i64, scratch_operands = 2 : i64, tpu.core_type = #tpu.core_type<tc>, window_params = [{transform_indices = @transform_0, window_bounds = array<i64: 2, 256>}, {transform_indices = @transform_1, window_bounds = array<i64: 2, 256>}, {transform_indices = @transform_2, window_bounds = array<i64: 256, 128>}, {pipeline_mode = #tpu.pipeline_mode<synchronous>, transform_indices = @transform_3, window_bounds = array<i64: 1, 128>}, {pipeline_mode = #tpu.pipeline_mode<synchronous>, transform_indices = @transform_4, window_bounds = array<i64: 128, 32>}, {pipeline_mode = #tpu.pipeline_mode<synchronous>, transform_indices = @transform_5, window_bounds = array<i64: 1, 32>}, {pipeline_mode = #tpu.pipeline_mode<synchronous>, transform_indices = @transform_6, window_bounds = array<i64: 2, 32>}, {pipeline_mode = #tpu.pipeline_mode<synchronous>, transform_indices = @transform_7, window_bounds = array<i64: 2, 32>}]} {
    %c0_i32 = arith.constant 0 : i32
    %0 = arith.cmpi eq, %arg0, %c0_i32 : i32
    %1 = arith.extui %0 : i1 to i32
    %c0_i32_0 = arith.constant 0 : i32
    %2 = arith.cmpi ne, %1, %c0_i32_0 : i32
    scf.if %2 {
      %cst_16 = arith.constant 0.000000e+00 : f32
      %19 = vector.broadcast %cst_16 : f32 to vector<2x128xf32>
      %c0_17 = arith.constant 0 : index
      %c0_18 = arith.constant 0 : index
      %20 = vector.load %arg9[%c0_17, %c0_18] : memref<2x128xf32, #tpu.memory_space<vmem>>, vector<2x128xf32>
      tpu.vector_store %arg9[%c0_17, %c0_18], %19 {strides = array<i32>} : memref<2x128xf32, #tpu.memory_space<vmem>>, vector<2x128xf32>,
      %cst_19 = arith.constant 0.000000e+00 : f32
      %21 = vector.broadcast %cst_19 : f32 to vector<2x128xf32>
      %c0_20 = arith.constant 0 : index
      %c0_21 = arith.constant 0 : index
      %22 = vector.load %arg10[%c0_20, %c0_21] : memref<2x128xf32, #tpu.memory_space<vmem>>, vector<2x128xf32>
      tpu.vector_store %arg10[%c0_20, %c0_21], %21 {strides = array<i32>} : memref<2x128xf32, #tpu.memory_space<vmem>>, vector<2x128xf32>,
    } else {
    }
    %c0 = arith.constant 0 : index
    %c0_1 = arith.constant 0 : index
    %3 = vector.load %arg3[%c0, %c0_1] : memref<256x128xbf16, #tpu.memory_space<vmem>>, vector<256x128xbf16>
    %c0_2 = arith.constant 0 : index
    %c0_3 = arith.constant 0 : index
    %4 = vector.load %arg9[%c0_2, %c0_3] : memref<2x128xf32, #tpu.memory_space<vmem>>, vector<2x128xf32>
    %c0_4 = arith.constant 0 : index
    %c0_5 = arith.constant 0 : index
    %5 = vector.load %arg1[%c0_4, %c0_5] : memref<2x256xf32, #tpu.memory_space<vmem>>, vector<2x256xf32>
    %6 = arith.truncf %5 : vector<2x256xf32> to vector<2x256xbf16>
    %cst = arith.constant dense<0.000000e+00> : vector<2x128xf32>
    %7 = tpu.matmul %6, %3, %cst {dimension_numbers = #tpu.dot_dimension_numbers<[1], [0], [0], [1], [0, 0, 1, 1], [], []>} : vector<2x256xbf16>, vector<256x128xbf16>, vector<2x128xf32> -> vector<2x128xf32>
    %8 = arith.addf %4, %7 : vector<2x128xf32>
    %c0_6 = arith.constant 0 : index
    %c0_7 = arith.constant 0 : index
    %9 = vector.load %arg9[%c0_6, %c0_7] : memref<2x128xf32, #tpu.memory_space<vmem>>, vector<2x128xf32>
    tpu.vector_store %arg9[%c0_6, %c0_7], %8 {strides = array<i32>} : memref<2x128xf32, #tpu.memory_space<vmem>>, vector<2x128xf32>,
    %c0_8 = arith.constant 0 : index
    %c0_9 = arith.constant 0 : index
    %10 = vector.load %arg10[%c0_8, %c0_9] : memref<2x128xf32, #tpu.memory_space<vmem>>, vector<2x128xf32>
    %c0_10 = arith.constant 0 : index
    %c0_11 = arith.constant 0 : index
    %11 = vector.load %arg2[%c0_10, %c0_11] : memref<2x256xf32, #tpu.memory_space<vmem>>, vector<2x256xf32>
    %12 = arith.truncf %11 : vector<2x256xf32> to vector<2x256xbf16>
    %cst_12 = arith.constant dense<0.000000e+00> : vector<2x128xf32>
    %13 = tpu.matmul %12, %3, %cst_12 {dimension_numbers = #tpu.dot_dimension_numbers<[1], [0], [0], [1], [0, 0, 1, 1], [], []>} : vector<2x256xbf16>, vector<256x128xbf16>, vector<2x128xf32> -> vector<2x128xf32>
    %14 = arith.addf %10, %13 : vector<2x128xf32>
    %c0_13 = arith.constant 0 : index
    %c0_14 = arith.constant 0 : index
    %15 = vector.load %arg10[%c0_13, %c0_14] : memref<2x128xf32, #tpu.memory_space<vmem>>, vector<2x128xf32>
    tpu.vector_store %arg10[%c0_13, %c0_14], %14 {strides = array<i32>} : memref<2x128xf32, #tpu.memory_space<vmem>>, vector<2x128xf32>,
    %c3_i32 = arith.constant 3 : i32
    %16 = arith.cmpi eq, %arg0, %c3_i32 : i32
    %17 = arith.extui %16 : i1 to i32
    %c0_i32_15 = arith.constant 0 : i32
    %18 = arith.cmpi ne, %17, %c0_i32_15 : i32
    scf.if %18 {
      %c0_16 = arith.constant 0 : index
      %c0_17 = arith.constant 0 : index
      %19 = vector.load %arg4[%c0_16, %c0_17] : memref<1x128xf32, #tpu.memory_space<vmem>>, vector<1x128xf32>
      %c0_18 = arith.constant 0 : index
      %c0_19 = arith.constant 0 : index
      %20 = vector.load %arg5[%c0_18, %c0_19] : memref<128x32xf32, #tpu.memory_space<vmem>>, vector<128x32xf32>
      %c0_20 = arith.constant 0 : index
      %c0_21 = arith.constant 0 : index
      %21 = vector.load %arg6[%c0_20, %c0_21] : memref<1x32xf32, #tpu.memory_space<vmem>>, vector<1x32xf32>
      %c0_22 = arith.constant 0 : index
      %c0_23 = arith.constant 0 : index
      %22 = vector.load %arg9[%c0_22, %c0_23] : memref<2x128xf32, #tpu.memory_space<vmem>>, vector<2x128xf32>
      %23 = vector.broadcast %19 : vector<1x128xf32> to vector<2x128xf32>
      %24 = arith.addf %22, %23 : vector<2x128xf32>
      %cst_24 = arith.constant 0.000000e+00 : f32
      %25 = vector.broadcast %cst_24 : f32 to vector<2x128xf32>
      %26 = arith.maximumf %24, %25 : vector<2x128xf32>
      %c0_25 = arith.constant 0 : index
      %c0_26 = arith.constant 0 : index
      %27 = vector.load %arg10[%c0_25, %c0_26] : memref<2x128xf32, #tpu.memory_space<vmem>>, vector<2x128xf32>
      %28 = vector.broadcast %19 : vector<1x128xf32> to vector<2x128xf32>
      %29 = arith.addf %27, %28 : vector<2x128xf32>
      %cst_27 = arith.constant 0.000000e+00 : f32
      %30 = vector.broadcast %cst_27 : f32 to vector<2x128xf32>
      %31 = arith.maximumf %29, %30 : vector<2x128xf32>
      %cst_28 = arith.constant dense<0.000000e+00> : vector<2x32xf32>
      %32 = tpu.matmul %26, %20, %cst_28 {dimension_numbers = #tpu.dot_dimension_numbers<[1], [0], [0], [1], [0, 0, 1, 1], [], []>} : vector<2x128xf32>, vector<128x32xf32>, vector<2x32xf32> -> vector<2x32xf32>
      %33 = vector.broadcast %21 : vector<1x32xf32> to vector<2x32xf32>
      %34 = arith.addf %32, %33 : vector<2x32xf32>
      %c0_29 = arith.constant 0 : index
      %c0_30 = arith.constant 0 : index
      %35 = vector.load %arg7[%c0_29, %c0_30] : memref<2x32xf32, #tpu.memory_space<vmem>>, vector<2x32xf32>
      tpu.vector_store %arg7[%c0_29, %c0_30], %34 {strides = array<i32>} : memref<2x32xf32, #tpu.memory_space<vmem>>, vector<2x32xf32>,
      %cst_31 = arith.constant dense<0.000000e+00> : vector<2x32xf32>
      %36 = tpu.matmul %31, %20, %cst_31 {dimension_numbers = #tpu.dot_dimension_numbers<[1], [0], [0], [1], [0, 0, 1, 1], [], []>} : vector<2x128xf32>, vector<128x32xf32>, vector<2x32xf32> -> vector<2x32xf32>
      %37 = vector.broadcast %21 : vector<1x32xf32> to vector<2x32xf32>
      %38 = arith.addf %36, %37 : vector<2x32xf32>
      %c0_32 = arith.constant 0 : index
      %c0_33 = arith.constant 0 : index
      %39 = vector.load %arg8[%c0_32, %c0_33] : memref<2x32xf32, #tpu.memory_space<vmem>>, vector<2x32xf32>
      tpu.vector_store %arg8[%c0_32, %c0_33], %38 {strides = array<i32>} : memref<2x32xf32, #tpu.memory_space<vmem>>, vector<2x32xf32>,
    } else {
    }
    return
  }
  func.func @transform_0(%arg0: i32) -> (i32, i32) {
    %c0_i32 = arith.constant 0 : i32
    %c0_i32_0 = arith.constant 0 : i32
    return %c0_i32, %arg0 : i32, i32
  }
  func.func @transform_1(%arg0: i32) -> (i32, i32) {
    %c0_i32 = arith.constant 0 : i32
    %c0_i32_0 = arith.constant 0 : i32
    return %c0_i32, %arg0 : i32, i32
  }
  func.func @transform_2(%arg0: i32) -> (i32, i32) {
    %c0_i32 = arith.constant 0 : i32
    %c0_i32_0 = arith.constant 0 : i32
    return %arg0, %c0_i32 : i32, i32
  }
  func.func @transform_3(%arg0: i32) -> (i32, i32) {
    %c0_i32 = arith.constant 0 : i32
    %c0_i32_0 = arith.constant 0 : i32
    %c0_i32_1 = arith.constant 0 : i32
    return %c0_i32, %c0_i32_0 : i32, i32
  }
  func.func @transform_4(%arg0: i32) -> (i32, i32) {
    %c0_i32 = arith.constant 0 : i32
    %c0_i32_0 = arith.constant 0 : i32
    %c0_i32_1 = arith.constant 0 : i32
    return %c0_i32, %c0_i32_0 : i32, i32
  }
  func.func @transform_5(%arg0: i32) -> (i32, i32) {
    %c0_i32 = arith.constant 0 : i32
    %c0_i32_0 = arith.constant 0 : i32
    %c0_i32_1 = arith.constant 0 : i32
    return %c0_i32, %c0_i32_0 : i32, i32
  }
  func.func @transform_6(%arg0: i32) -> (i32, i32) {
    %c0_i32 = arith.constant 0 : i32
    %c0_i32_0 = arith.constant 0 : i32
    %c0_i32_1 = arith.constant 0 : i32
    return %c0_i32, %c0_i32_0 : i32, i32
  }
  func.func @transform_7(%arg0: i32) -> (i32, i32) {
    %c0_i32 = arith.constant 0 : i32
    %c0_i32_0 = arith.constant 0 : i32
    %c0_i32_1 = arith.constant 0 : i32
    return %c0_i32, %c0_i32_0 : i32, i32
  }
}

</mosaic_0001>

<llo_original>
// kernel: tpu_custom_call.1
$region0: #{tpu_custom_call.1}
  #allocation0 [shape = 'u32[]', space=smem, size = 0x4, offset = 0x4, fixed_abs, tag = 'smem constant byte address 0x4 - core index']
  #allocation1 [shape = 'u32[144,128]{1,0:T(1,128)}', space=vmem, size = 0x12000, scoped, tag = 'internal scratch']
  #allocation2 [shape = 'f32[2,128]{1,0:T(2,128)}', space=vmem, size = 0x400, scoped, tag = 'scratch operand']
  #allocation3 [shape = 'f32[2,128]{1,0:T(2,128)}', space=vmem, size = 0x400, scoped, tag = 'scratch operand']
  %s0 = inlined_call_operand.vmem [shape: f32[2,1024], index: 0, kind: input, shape index: {}]
  %s1 = inlined_call_operand.vmem [shape: f32[2,1024], index: 1, kind: input, shape index: {}]
  %s2 = inlined_call_operand.hbm [shape: bf16[1024,128], index: 2, kind: input, shape index: {}]
  %s3 = inlined_call_operand.vmem [shape: f32[1,128], index: 3, kind: input, shape index: {}]
  %s4 = inlined_call_operand.vmem [shape: f32[128,32], index: 4, kind: input, shape index: {}]
  %s5 = inlined_call_operand.vmem [shape: f32[1,32], index: 5, kind: input, shape index: {}]
  %s6 = inlined_call_operand.hbm [shape: f32[2,32], index: 6, kind: output, shape index: {0}]
  %s7 = inlined_call_operand.hbm [shape: f32[2,32], index: 7, kind: output, shape index: {1}]
  %8 = xla_tuple %s6, %s7
  %s9 = sld [smem:[#allocation0]]
  $region77: #{tpu_custom_call.1} parent=0
    _
  %s11 = ssub.s32 1, %s9
  %s12 = scalar_select 0, %s11, %s9
  $region1: #{tpu_custom_call.1} parent=0
    #allocation4 [shape = 'u8[131072]{0}', space=vmem, size = 0x20000, scoped, tag = 'input window, operand 2']
    #allocation5 [shape = 's32[2]{0}', space=sflag, size = 0x8, scoped, tag = 'scoped memory for tpu_custom_call.1']
    #allocation6 [shape = 's32[2]{0}', space=sflag, size = 0x8, scoped, tag = 'scoped memory for tpu_custom_call.1']
    #allocation7 [shape = 'u8[1024]{0}', space=vmem, size = 0x400, scoped, tag = 'output window, operand 0, single buffered']
    #allocation8 [shape = 'u8[1024]{0}', space=vmem, size = 0x400, scoped, tag = 'output window, operand 1, single buffered']
    #allocation9 [shape = 's32[1]{0}', space=sflag, size = 0x4, scoped, tag = 'scoped memory for tpu_custom_call.1']
    %13 = vsyncpa [#allocation5], 0
    %s14 = scalar_lea.sflag [#allocation5], 1
    %15 = vsyncpa %s14, 0
    %16 = vsyncpa [#allocation6], 0
    %17 = vsyncpa [#allocation9], 0
    loop: start=0, step=1, limit=6
    $region2: #{tpu_custom_call.1} parent=1 // loop_pre_header
      _
    $region3: #{tpu_custom_call.1} parent=1 // loop_header
      %s19 = sphi 0, %s23
      %p20 = scmp.ge.s32.totalorder %s19, 6
      %s29 = sphi 0, %s31
      %s32 = sphi 0, %s29
      %s33 = sphi 0, %s32
      %s49 = sphi 0, %s33
      %s55 = sphi 0, %s57
      %s58 = sphi 0, %s55
      %s59 = sphi 0, %s58
      %s75 = sphi 0, %s59
      %s81 = sphi 0, %s83
      %s84 = sphi 0, %s81
      %s85 = sphi 0, %s84
      %s101 = sphi 0, %s85
      %s105 = sphi 0, %s105
      %s107 = sphi 0, %s105
      %s108 = sphi 0, %s107
      %s122 = sphi 0, %s108
      %s126 = sphi 0, %s126
      %s128 = sphi 0, %s126
      %s129 = sphi 0, %s128
      %s143 = sphi 0, %s129
      %s147 = sphi 0, %s147
      %s149 = sphi 0, %s147
      %s150 = sphi 0, %s149
      %s164 = sphi 0, %s150
      %s168 = sphi 0, %s168
      %s170 = sphi 0, %s168
      %s171 = sphi 0, %s170
      %s185 = sphi 0, %s171
      %s189 = sphi 0, %s189
      %s191 = sphi 0, %s189
      %s192 = sphi 0, %s191
      %s206 = sphi 0, %s192
    $region4: #{tpu_custom_call.1} parent=1 // loop_header_branch
      %22 = sbr.rel (%p20) target = $region8
    $region5: #{tpu_custom_call.1} parent=1 // loop_body
      %s24 = ssub.s32 %s19, 1
      %s25 = ssub.s32 %s19, 2
      %s26 = sadd.s32 %s19, 1
      %s27 = ssub.s32 %s19, %s26
      %p28 = scmp.eq.s32.totalorder %s27, 0
      %s30 = sadd.s32 %s29, 1
      %s31 = scalar_select %p28, %s29, %s30
      %p34 = pneg %p28
      %p35 = scmp.eq.s32.totalorder %s19, 3
      %p36 = por %p34, %p35
      %p37 = scmp.ne.s32.totalorder %s29, %s32
      %p38 = scmp.eq.s32.totalorder %s19, 0
      %p39 = por %p37, %p38
      %p40 = scmp.ne.s32.totalorder %s29, %s32
      %p41 = scmp.eq.s32.totalorder %s24, 3
      %p42 = por %p40, %p41
      %p43 = scmp.ne.s32.totalorder %s32, %s33
      %p44 = scmp.eq.s32.totalorder %s24, 0
      %p45 = por %p43, %p44
      %p46 = scmp.ne.s32.totalorder %s32, %s33
      %p47 = scmp.eq.s32.totalorder %s25, 3
      %p48 = por %p46, %p47
      %p50 = scmp.ne.s32.totalorder %s33, %s49
      %p51 = scmp.eq.s32.totalorder %s25, 0
      %p52 = por %p50, %p51
      %s53 = ssub.s32 %s19, %s26
      %p54 = scmp.eq.s32.totalorder %s53, 0
      %s56 = sadd.s32 %s55, 1
      %s57 = scalar_select %p54, %s55, %s56
      %p60 = pneg %p54
      %p61 = scmp.eq.s32.totalorder %s19, 3
      %p62 = por %p60, %p61
      %p63 = scmp.ne.s32.totalorder %s55, %s58
      %p64 = scmp.eq.s32.totalorder %s19, 0
      %p65 = por %p63, %p64
      %p66 = scmp.ne.s32.totalorder %s55, %s58
      %p67 = scmp.eq.s32.totalorder %s24, 3
      %p68 = por %p66, %p67
      %p69 = scmp.ne.s32.totalorder %s58, %s59
      %p70 = scmp.eq.s32.totalorder %s24, 0
      %p71 = por %p69, %p70
      %p72 = scmp.ne.s32.totalorder %s58, %s59
      %p73 = scmp.eq.s32.totalorder %s25, 3
      %p74 = por %p72, %p73
      %p76 = scmp.ne.s32.totalorder %s59, %s75
      %p77 = scmp.eq.s32.totalorder %s25, 0
      %p78 = por %p76, %p77
      %s79 = ssub.s32 %s19, %s26
      %p80 = scmp.eq.s32.totalorder %s79, 0
      %s82 = sadd.s32 %s81, 1
      %s83 = scalar_select %p80, %s81, %s82
      %p86 = pneg %p80
      %p87 = scmp.eq.s32.totalorder %s19, 3
      %p88 = por %p86, %p87
      %p89 = scmp.ne.s32.totalorder %s81, %s84
      %p90 = scmp.eq.s32.totalorder %s19, 0
      %p91 = por %p89, %p90
      %p92 = scmp.ne.s32.totalorder %s81, %s84
      %p93 = scmp.eq.s32.totalorder %s24, 3
      %p94 = por %p92, %p93
      %p95 = scmp.ne.s32.totalorder %s84, %s85
      %p96 = scmp.eq.s32.totalorder %s24, 0
      %p97 = por %p95, %p96
      %p98 = scmp.ne.s32.totalorder %s84, %s85
      %p99 = scmp.eq.s32.totalorder %s25, 3
      %p100 = por %p98, %p99
      %p102 = scmp.ne.s32.totalorder %s85, %s101
      %p103 = scmp.eq.s32.totalorder %s25, 0
      %p104 = por %p102, %p103
      %s106 = sadd.s32 %s105, 1
      %p109 = scmp.eq.s32.totalorder %s19, 3
      %p110 = scmp.ne.s32.totalorder %s105, %s107
      %p111 = scmp.eq.s32.totalorder %s19, 0
      %p112 = por %p110, %p111
      %p113 = scmp.ne.s32.totalorder %s105, %s107
      %p114 = scmp.eq.s32.totalorder %s24, 3
      %p115 = por %p113, %p114
      %p116 = scmp.ne.s32.totalorder %s107, %s108
      %p117 = scmp.eq.s32.totalorder %s24, 0
      %p118 = por %p116, %p117
      %p119 = scmp.ne.s32.totalorder %s107, %s108
      %p120 = scmp.eq.s32.totalorder %s25, 3
      %p121 = por %p119, %p120
      %p123 = scmp.ne.s32.totalorder %s108, %s122
      %p124 = scmp.eq.s32.totalorder %s25, 0
      %p125 = por %p123, %p124
      %s127 = sadd.s32 %s126, 1
      %p130 = scmp.eq.s32.totalorder %s19, 3
      %p131 = scmp.ne.s32.totalorder %s126, %s128
      %p132 = scmp.eq.s32.totalorder %s19, 0
      %p133 = por %p131, %p132
      %p134 = scmp.ne.s32.totalorder %s126, %s128
      %p135 = scmp.eq.s32.totalorder %s24, 3
      %p136 = por %p134, %p135
      %p137 = scmp.ne.s32.totalorder %s128, %s129
      %p138 = scmp.eq.s32.totalorder %s24, 0
      %p139 = por %p137, %p138
      %p140 = scmp.ne.s32.totalorder %s128, %s129
      %p141 = scmp.eq.s32.totalorder %s25, 3
      %p142 = por %p140, %p141
      %p144 = scmp.ne.s32.totalorder %s129, %s143
      %p145 = scmp.eq.s32.totalorder %s25, 0
      %p146 = por %p144, %p145
      %s148 = sadd.s32 %s147, 1
      %p151 = scmp.eq.s32.totalorder %s19, 3
      %p152 = scmp.ne.s32.totalorder %s147, %s149
      %p153 = scmp.eq.s32.totalorder %s19, 0
      %p154 = por %p152, %p153
      %p155 = scmp.ne.s32.totalorder %s147, %s149
      %p156 = scmp.eq.s32.totalorder %s24, 3
      %p157 = por %p155, %p156
      %p158 = scmp.ne.s32.totalorder %s149, %s150
      %p159 = scmp.eq.s32.totalorder %s24, 0
      %p160 = por %p158, %p159
      %p161 = scmp.ne.s32.totalorder %s149, %s150
      %p162 = scmp.eq.s32.totalorder %s25, 3
      %p163 = por %p161, %p162
      %p165 = scmp.ne.s32.totalorder %s150, %s164
      %p166 = scmp.eq.s32.totalorder %s25, 0
      %p167 = por %p165, %p166
      %s169 = sadd.s32 %s168, 1
      %p172 = scmp.eq.s32.totalorder %s19, 3
      %p173 = scmp.ne.s32.totalorder %s168, %s170
      %p174 = scmp.eq.s32.totalorder %s19, 0
      %p175 = por %p173, %p174
      %p176 = scmp.ne.s32.totalorder %s168, %s170
      %p177 = scmp.eq.s32.totalorder %s24, 3
      %p178 = por %p176, %p177
      %p179 = scmp.ne.s32.totalorder %s170, %s171
      %p180 = scmp.eq.s32.totalorder %s24, 0
      %p181 = por %p179, %p180
      %p182 = scmp.ne.s32.totalorder %s170, %s171
      %p183 = scmp.eq.s32.totalorder %s25, 3
      %p184 = por %p182, %p183
      %p186 = scmp.ne.s32.totalorder %s171, %s185
      %p187 = scmp.eq.s32.totalorder %s25, 0
      %p188 = por %p186, %p187
      %s190 = sadd.s32 %s189, 1
      %p193 = scmp.eq.s32.totalorder %s19, 3
      %p194 = scmp.ne.s32.totalorder %s189, %s191
      %p195 = scmp.eq.s32.totalorder %s19, 0
      %p196 = por %p194, %p195
      %p197 = scmp.ne.s32.totalorder %s189, %s191
      %p198 = scmp.eq.s32.totalorder %s24, 3
      %p199 = por %p197, %p198
      %p200 = scmp.ne.s32.totalorder %s191, %s192
      %p201 = scmp.eq.s32.totalorder %s24, 0
      %p202 = por %p200, %p201
      %p203 = scmp.ne.s32.totalorder %s191, %s192
      %p204 = scmp.eq.s32.totalorder %s25, 3
      %p205 = por %p203, %p204
      %p207 = scmp.ne.s32.totalorder %s192, %s206
      %p208 = scmp.eq.s32.totalorder %s25, 0
      %p209 = por %p207, %p208
      %p210 = scmp.le.s32.totalorder 1, %s19
      %p211 = scmp.lt.s32.totalorder %s19, 5
      %p212 = pnand %p210, %p211
      %p213 = pneg %p212
      // Predicated region
      $region9: #{tpu_custom_call.1} parent=5 // pred_check
        _
      $region10: #{tpu_custom_call.1} parent=5 // pred_check_branch
        %215 = sbr.rel (%p212) target = $region12
      $region11: #{tpu_custom_call.1} parent=5 // pred_region
        %s216 = ssub.s32 %s19, 1
        // Predicated region
        $region13: #{tpu_custom_call.1} parent=11 // pred_check
          %p217 = pneg %p118
        $region14: #{tpu_custom_call.1} parent=11 // pred_check_branch
          %219 = sbr.rel (%p217) target = $region16
        $region15: #{tpu_custom_call.1} parent=11 // pred_region
          _
        $region16: #{tpu_custom_call.1} parent=11 // pred_fallthru
          _
        // Predicated region
        $region17: #{tpu_custom_call.1} parent=11 // pred_check
          %p220 = pneg %p139
        $region18: #{tpu_custom_call.1} parent=11 // pred_check_branch
          %222 = sbr.rel (%p220) target = $region20
        $region19: #{tpu_custom_call.1} parent=11 // pred_region
          _
        $region20: #{tpu_custom_call.1} parent=11 // pred_fallthru
          _
        // Predicated region
        $region21: #{tpu_custom_call.1} parent=11 // pred_check
          %p223 = pneg %p160
        $region22: #{tpu_custom_call.1} parent=11 // pred_check_branch
          %225 = sbr.rel (%p223) target = $region24
        $region23: #{tpu_custom_call.1} parent=11 // pred_region
          _
        $region24: #{tpu_custom_call.1} parent=11 // pred_fallthru
          _
      $region12: #{tpu_custom_call.1} parent=5 // pred_fallthru
        _
      %p226 = scmp.lt.s32.totalorder %s19, 4
      // Predicated region
      $region25: #{tpu_custom_call.1} parent=5 // pred_check
        %p227 = pneg %p226
      $region26: #{tpu_custom_call.1} parent=5 // pred_check_branch
        %229 = sbr.rel (%p227) target = $region28
      $region27: #{tpu_custom_call.1} parent=5 // pred_region
        // Predicated region
        $region29: #{tpu_custom_call.1} parent=27 // pred_check
          %p230 = pneg %p39
        $region30: #{tpu_custom_call.1} parent=27 // pred_check_branch
          %232 = sbr.rel (%p230) target = $region32
        $region31: #{tpu_custom_call.1} parent=27 // pred_region
          %s233 = smul.u32 2, %s19
          %p234 = scmp.lt.s32.totalorder %s233, 7
          %s235 = scalar_select %p234, %s233, 7
          %s236 = smul.addr %s235, 2
          %s237 = scalar_lea.vmem %s0, %s236
          %s238 = smul.u32 2, %s19
        $region32: #{tpu_custom_call.1} parent=27 // pred_fallthru
          _
        // Predicated region
        $region33: #{tpu_custom_call.1} parent=27 // pred_check
          %p239 = pneg %p65
        $region34: #{tpu_custom_call.1} parent=27 // pred_check_branch
          %241 = sbr.rel (%p239) target = $region36
        $region35: #{tpu_custom_call.1} parent=27 // pred_region
          %s242 = smul.u32 2, %s19
          %p243 = scmp.lt.s32.totalorder %s242, 7
          %s244 = scalar_select %p243, %s242, 7
          %s245 = smul.addr %s244, 2
          %s246 = scalar_lea.vmem %s1, %s245
          %s247 = smul.u32 2, %s19
        $region36: #{tpu_custom_call.1} parent=27 // pred_fallthru
          _
        // Predicated region
        $region37: #{tpu_custom_call.1} parent=27 // pred_check
          %p248 = pneg %p91
        $region38: #{tpu_custom_call.1} parent=27 // pred_check_branch
          %250 = sbr.rel (%p248) target = $region40
        $region39: #{tpu_custom_call.1} parent=27 // pred_region
          %s251 = sand.u32 %s81, 1
          %s252 = scalar_lea.sflag [#allocation5], %s251
          %s253 = sand.u32 %s81, 1
          %s254 = smul.addr %s253, 128
          %s255 = scalar_lea.vmem [#allocation4], %s254
          %s256 = smul.u32 32, %s19
          %s258 = ssub.s32 2048, 2048
          %259 = vsyncadd %s252, %s258
          %s260 = smul.addr %s256, 64
          %s261 = scalar_lea.hbm %s2, %s260
          %s262 = sshll.u32 %s255, 4
          %s263 = int_to_ptr.vmem [resolvable:$true] %s262
          %268 = dma.hbm_to_vmem [thread:$0]  %s261, 2048, %s263, %s252, 64, 64, 4
        $region40: #{tpu_custom_call.1} parent=27 // pred_fallthru
          _
      $region28: #{tpu_custom_call.1} parent=5 // pred_fallthru
        _
      %p269 = scmp.le.s32.totalorder 1, %s19
      %p270 = scmp.lt.s32.totalorder %s19, 5
      %p271 = pnand %p269, %p270
      %p272 = pneg %p271
      // Predicated region
      $region41: #{tpu_custom_call.1} parent=5 // pred_check
        _
      $region42: #{tpu_custom_call.1} parent=5 // pred_check_branch
        %274 = sbr.rel (%p271) target = $region44
      $region43: #{tpu_custom_call.1} parent=5 // pred_region
        %s275 = ssub.s32 %s19, 1
        %s276 = sand.u32 %s84, 1
        %s277 = scalar_lea.sflag [#allocation5], %s276
        %s278 = sand.u32 %s84, 1
        %s279 = smul.addr %s278, 128
        %s280 = scalar_lea.vmem [#allocation4], %s279
        // Predicated region
        $region45: #{tpu_custom_call.1} parent=43 // pred_check
          %p281 = pneg %p97
        $region46: #{tpu_custom_call.1} parent=43 // pred_check_branch
          %283 = sbr.rel (%p281) target = $region48
        $region47: #{tpu_custom_call.1} parent=43 // pred_region
          %284 = dma.done %s277, 2048
        $region48: #{tpu_custom_call.1} parent=43 // pred_fallthru
          _
        %s285 = smul.u32 2, %s24
        %p286 = scmp.lt.s32.totalorder %s285, 7
        %s287 = scalar_select %p286, %s285, 7
        %s288 = smul.addr %s287, 2
        %s289 = scalar_lea.vmem %s0, %s288
        %p290 = pneg %p45
        %p291 = pneg %p42
        %s292 = smul.u32 2, %s24
        %p293 = scmp.lt.s32.totalorder %s292, 7
        %s294 = scalar_select %p293, %s292, 7
        %s295 = smul.addr %s294, 2
        %s296 = scalar_lea.vmem %s1, %s295
        %p297 = pneg %p71
        %p298 = pneg %p68
        %s299 = sand.u32 %s84, 1
        %s300 = scalar_lea.sflag [#allocation5], %s299
        %s301 = sand.u32 %s84, 1
        %s302 = smul.addr %s301, 128
        %s303 = scalar_lea.vmem [#allocation4], %s302
        %p304 = pneg %p97
        %p305 = pneg %p94
        %p306 = pneg %p118
        %p307 = pneg %p115
        %p308 = pneg %p139
        %p309 = pneg %p136
        %p310 = pneg %p160
        %p311 = pneg %p157
        %p312 = pneg %p181
        %p313 = pneg %p178
        %p314 = pneg %p202
        %p315 = pneg %p199
        %s316 = smul.u32 2, %s24
        %p317 = scmp.lt.s32.totalorder %s316, 7
        %s318 = scalar_select %p317, %s316, 7
        %s319 = smul.addr %s318, 2
        %s320 = scalar_lea.vmem %s0, %s319
        %s321 = smul.u32 2, %s24
        %s322 = smul.u32 2, %s24
        %p323 = scmp.lt.s32.totalorder %s322, 7
        %s324 = scalar_select %p323, %s322, 7
        %s325 = smul.addr %s324, 2
        %s326 = scalar_lea.vmem %s1, %s325
        %s327 = smul.u32 2, %s24
        %s328 = smul.u32 32, %s24
        %p330 = scmp.eq.s32.totalorder %s24, 0
        // Predicated region
        $region49: #{tpu_custom_call.1} parent=43 // pred_check
          %p331 = pneg %p330
        $region50: #{tpu_custom_call.1} parent=43 // pred_check_branch
          %333 = sbr.rel (%p331) target = $region52
        $region51: #{tpu_custom_call.1} parent=43 // pred_region
          %334 = vst [vmem:[#allocation2] sm:$0x3] 0.0
          %335 = vst [vmem:[#allocation3] sm:$0x3] 0.0
        $region52: #{tpu_custom_call.1} parent=43 // pred_fallthru
          _
        %v336 = vld [vmem:[%s280] sm:$0xf]
        %v337 = vld [vmem:[%s280 + $0x4] sm:$0xf]
        %v338 = vld [vmem:[%s280 + $0x8] sm:$0xf]
        %v339 = vld [vmem:[%s280 + $0xc] sm:$0xf]
        %v340 = vld [vmem:[%s280 + $0x10] sm:$0xf]
        %v341 = vld [vmem:[%s280 + $0x14] sm:$0xf]
        %v342 = vld [vmem:[%s280 + $0x18] sm:$0xf]
        %v343 = vld [vmem:[%s280 + $0x1c] sm:$0xf]
        %v344 = vld [vmem:[%s280 + $0x20] sm:$0xf]
        %v345 = vld [vmem:[%s280 + $0x24] sm:$0xf]
        %v346 = vld [vmem:[%s280 + $0x28] sm:$0xf]
        %v347 = vld [vmem:[%s280 + $0x2c] sm:$0xf]
        %v348 = vld [vmem:[%s280 + $0x30] sm:$0xf]
        %v349 = vld [vmem:[%s280 + $0x34] sm:$0xf]
        %v350 = vld [vmem:[%s280 + $0x38] sm:$0xf]
        %v351 = vld [vmem:[%s280 + $0x3c] sm:$0xf]
        %v352 = vld [vmem:[%s280 + $0x40] sm:$0xf]
        %v353 = vld [vmem:[%s280 + $0x44] sm:$0xf]
        %v354 = vld [vmem:[%s280 + $0x48] sm:$0xf]
        %v355 = vld [vmem:[%s280 + $0x4c] sm:$0xf]
        %v356 = vld [vmem:[%s280 + $0x50] sm:$0xf]
        %v357 = vld [vmem:[%s280 + $0x54] sm:$0xf]
        %v358 = vld [vmem:[%s280 + $0x58] sm:$0xf]
        %v359 = vld [vmem:[%s280 + $0x5c] sm:$0xf]
        %v360 = vld [vmem:[%s280 + $0x60] sm:$0xf]
        %v361 = vld [vmem:[%s280 + $0x64] sm:$0xf]
        %v362 = vld [vmem:[%s280 + $0x68] sm:$0xf]
        %v363 = vld [vmem:[%s280 + $0x6c] sm:$0xf]
        %v364 = vld [vmem:[%s280 + $0x70] sm:$0xf]
        %v365 = vld [vmem:[%s280 + $0x74] sm:$0xf]
        %v366 = vld [vmem:[%s280 + $0x78] sm:$0xf]
        %v367 = vld [vmem:[%s280 + $0x7c] sm:$0xf]
        %v368 = vld [vmem:[#allocation2] sm:$0x3]
        %v369 = vld [vmem:[%s320] sm:$0xf]
        %v372 = vunpack.c.l.s4 1983009808
        %v373 = vunpack.c.0.s8 %v372
        %v374 = vlaneseq
        %v375 = vshrl.u32 %v374, 7
        %v376 = vsub.s32 %v373, %v375
        %v377 = vrot.slane %v369, %v376
        %v378 = vcombine.high %v377, %v377
        %v381 = vpack.c.bf16 %v377, %v377
        %v382 = vpack.c.bf16 %v378, %v378
        %v415 = vunpack.c.l.b16 %v336
        %v416 = vunpack.c.l.b16 %v337
        %v417 = vunpack.c.l.b16 %v338
        %v418 = vunpack.c.l.b16 %v339
        %v419 = vunpack.c.l.b16 %v340
        %v420 = vunpack.c.l.b16 %v341
        %v421 = vunpack.c.l.b16 %v342
        %v422 = vunpack.c.l.b16 %v343
        %v423 = vunpack.c.l.b16 %v344
        %v424 = vunpack.c.l.b16 %v345
        %v425 = vunpack.c.l.b16 %v346
        %v426 = vunpack.c.l.b16 %v347
        %v427 = vunpack.c.l.b16 %v348
        %v428 = vunpack.c.l.b16 %v349
        %v429 = vunpack.c.l.b16 %v350
        %v430 = vunpack.c.l.b16 %v351
        %v431 = vunpack.c.l.b16 %v352
        %v432 = vunpack.c.l.b16 %v353
        %v433 = vunpack.c.l.b16 %v354
        %v434 = vunpack.c.l.b16 %v355
        %v435 = vunpack.c.l.b16 %v356
        %v436 = vunpack.c.l.b16 %v357
        %v437 = vunpack.c.l.b16 %v358
        %v438 = vunpack.c.l.b16 %v359
        %v439 = vunpack.c.l.b16 %v360
        %v440 = vunpack.c.l.b16 %v361
        %v441 = vunpack.c.l.b16 %v362
        %v442 = vunpack.c.l.b16 %v363
        %v443 = vunpack.c.l.b16 %v364
        %v444 = vunpack.c.l.b16 %v365
        %v445 = vunpack.c.l.b16 %v366
        %v446 = vunpack.c.l.b16 %v367
        %v447 = vpack.c.b16 %v416, %v415
        %v448 = vpack.c.b16 %v418, %v417
        %v449 = vpack.c.b16 %v420, %v419
        %v450 = vpack.c.b16 %v422, %v421
        %v451 = vpack.c.b16 %v424, %v423
        %v452 = vpack.c.b16 %v426, %v425
        %v453 = vpack.c.b16 %v428, %v427
        %v454 = vpack.c.b16 %v430, %v429
        %v455 = vpack.c.b16 %v432, %v431
        %v456 = vpack.c.b16 %v434, %v433
        %v457 = vpack.c.b16 %v436, %v435
        %v458 = vpack.c.b16 %v438, %v437
        %v459 = vpack.c.b16 %v440, %v439
        %v460 = vpack.c.b16 %v442, %v441
        %v461 = vpack.c.b16 %v444, %v443
        %v462 = vpack.c.b16 %v446, %v445
        %479 = vmatprep.subr.bf16.mxu0 0
        %480 = vmatpush1.bf16.msra.mxu0 %v447
        %481 = vmatprep.subr.bf16.mxu0 0
        %482 = vmatpush1.bf16.msra.mxu0 %v448
        %483 = vmatprep.subr.bf16.mxu0 0
        %484 = vmatpush1.bf16.msra.mxu0 %v449
        %485 = vmatprep.subr.bf16.mxu0 0
        %486 = vmatpush1.bf16.msra.mxu0 %v450
        %487 = vmatprep.subr.bf16.mxu0 0
        %488 = vmatpush1.bf16.msra.mxu0 %v451
        %489 = vmatprep.subr.bf16.mxu0 0
        %490 = vmatpush1.bf16.msra.mxu0 %v452
        %491 = vmatprep.subr.bf16.mxu0 0
        %492 = vmatpush1.bf16.msra.mxu0 %v453
        %493 = vmatprep.subr.bf16.mxu0 0
        %494 = vmatpush1.bf16.msra.mxu0 %v454
        %495 = vmatprep.subr.bf16.mxu0 0
        %496 = vmatpush1.bf16.msra.mxu0 %v455
        %497 = vmatprep.subr.bf16.mxu0 0
        %498 = vmatpush1.bf16.msra.mxu0 %v456
        %499 = vmatprep.subr.bf16.mxu0 0
        %500 = vmatpush1.bf16.msra.mxu0 %v457
        %501 = vmatprep.subr.bf16.mxu0 0
        %502 = vmatpush1.bf16.msra.mxu0 %v458
        %503 = vmatprep.subr.bf16.mxu0 0
        %504 = vmatpush1.bf16.msra.mxu0 %v459
        %505 = vmatprep.subr.bf16.mxu0 0
        %506 = vmatpush1.bf16.msra.mxu0 %v460
        %507 = vmatprep.subr.bf16.mxu0 0
        %508 = vmatpush1.bf16.msra.mxu0 %v461
        %509 = vmatprep.subr.bf16.mxu0 0
        %510 = vmatpush1.bf16.msra.mxu0 %v462
        %511 = vmatprep.mubr.bf16.mxu0 %v382
        %512 = vmatmul.mubr.bf16.gmra.mrb[0].mxu0 %v381
        %v513 = vpop.f32.mrb[0].mxu0
        %v514 = vadd.f32 0.0, %v513
        %v515 = vpop.f32.mrb[0].mxu0
        %v516 = vpop.f32.mrb[0].mxu0
        %v517 = vpop.f32.mrb[0].mxu0
        %518 = vdwg.mxu0
        %v519 = vadd.f32 %v368, %v514
        %520 = vst [vmem:[#allocation2] sm:$0x3] %v519
        %v521 = vld [vmem:[#allocation3] sm:$0x3]
        %v522 = vld [vmem:[%s326] sm:$0xf]
        %v525 = vunpack.c.l.s4 1983009808
        %v526 = vunpack.c.0.s8 %v525
        %v527 = vlaneseq
        %v528 = vshrl.u32 %v527, 7
        %v529 = vsub.s32 %v526, %v528
        %v530 = vrot.slane %v522, %v529
        %v531 = vcombine.high %v530, %v530
        %v534 = vpack.c.bf16 %v530, %v530
        %v535 = vpack.c.bf16 %v531, %v531
        %536 = vmatprep.subr.bf16.mxu0 0
        %537 = vmatpush1.bf16.msra.mxu0 %v447
        %538 = vmatprep.subr.bf16.mxu0 0
        %539 = vmatpush1.bf16.msra.mxu0 %v448
        %540 = vmatprep.subr.bf16.mxu0 0
        %541 = vmatpush1.bf16.msra.mxu0 %v449
        %542 = vmatprep.subr.bf16.mxu0 0
        %543 = vmatpush1.bf16.msra.mxu0 %v450
        %544 = vmatprep.subr.bf16.mxu0 0
        %545 = vmatpush1.bf16.msra.mxu0 %v451
        %546 = vmatprep.subr.bf16.mxu0 0
        %547 = vmatpush1.bf16.msra.mxu0 %v452
        %548 = vmatprep.subr.bf16.mxu0 0
        %549 = vmatpush1.bf16.msra.mxu0 %v453
        %550 = vmatprep.subr.bf16.mxu0 0
        %551 = vmatpush1.bf16.msra.mxu0 %v454
        %552 = vmatprep.subr.bf16.mxu0 0
        %553 = vmatpush1.bf16.msra.mxu0 %v455
        %554 = vmatprep.subr.bf16.mxu0 0
        %555 = vmatpush1.bf16.msra.mxu0 %v456
        %556 = vmatprep.subr.bf16.mxu0 0
        %557 = vmatpush1.bf16.msra.mxu0 %v457
        %558 = vmatprep.subr.bf16.mxu0 0
        %559 = vmatpush1.bf16.msra.mxu0 %v458
        %560 = vmatprep.subr.bf16.mxu0 0
        %561 = vmatpush1.bf16.msra.mxu0 %v459
        %562 = vmatprep.subr.bf16.mxu0 0
        %563 = vmatpush1.bf16.msra.mxu0 %v460
        %564 = vmatprep.subr.bf16.mxu0 0
        %565 = vmatpush1.bf16.msra.mxu0 %v461
        %566 = vmatprep.subr.bf16.mxu0 0
        %567 = vmatpush1.bf16.msra.mxu0 %v462
        %568 = vmatprep.mubr.bf16.mxu0 %v535
        %569 = vmatmul.mubr.bf16.gmra.mrb[0].mxu0 %v534
        %v570 = vpop.f32.mrb[0].mxu0
        %v571 = vadd.f32 0.0, %v570
        %v572 = vpop.f32.mrb[0].mxu0
        %v573 = vpop.f32.mrb[0].mxu0
        %v574 = vpop.f32.mrb[0].mxu0
        %575 = vdwg.mxu0
        %v576 = vadd.f32 %v521, %v571
        %577 = vst [vmem:[#allocation3] sm:$0x3] %v576
        %p578 = scmp.eq.s32.totalorder %s24, 3
        // Predicated region
        $region53: #{tpu_custom_call.1} parent=43 // pred_check
          %p579 = pneg %p578
        $region54: #{tpu_custom_call.1} parent=43 // pred_check_branch
          %581 = sbr.rel (%p579) target = $region56
        $region55: #{tpu_custom_call.1} parent=43 // pred_region
          %v582 = vld [vmem:[%s3] sm:$0x1]
          %v583 = vld [vmem:[%s4] sm:$0xff]
          %v584 = vld [vmem:[%s4 + $0x8] sm:$0xff]
          %v585 = vld [vmem:[%s4 + $0x10] sm:$0xff]
          %v586 = vld [vmem:[%s4 + $0x18] sm:$0xff]
          %v587 = vld [vmem:[%s4 + $0x20] sm:$0xff]
          %v588 = vld [vmem:[%s4 + $0x28] sm:$0xff]
          %v589 = vld [vmem:[%s4 + $0x30] sm:$0xff]
          %v590 = vld [vmem:[%s4 + $0x38] sm:$0xff]
          %v591 = vld [vmem:[%s4 + $0x40] sm:$0xff]
          %v592 = vld [vmem:[%s4 + $0x48] sm:$0xff]
          %v593 = vld [vmem:[%s4 + $0x50] sm:$0xff]
          %v594 = vld [vmem:[%s4 + $0x58] sm:$0xff]
          %v595 = vld [vmem:[%s4 + $0x60] sm:$0xff]
          %v596 = vld [vmem:[%s4 + $0x68] sm:$0xff]
          %v597 = vld [vmem:[%s4 + $0x70] sm:$0xff]
          %v598 = vld [vmem:[%s4 + $0x78] sm:$0xff]
          %v599 = vld [vmem:[%s5] sm:$0x1]
          %v600 = vld [vmem:[#allocation2] sm:$0x3]
          %v602 = vlaneseq
          %v603 = vshrl.u32 %v602, 7
          %v604 = vsub.s32 0, %v603
          %v605 = vrot.slane %v582, %v604
          %v607 = vadd.f32 %v600, %v605
          %v608 = vmax.f32 %v607, 0.0
          %v609 = vld [vmem:[#allocation3] sm:$0x3]
          %v610 = vadd.f32 %v609, %v605
          %v611 = vmax.f32 %v610, 0.0
          %v613 = vlaneseq
          %v614 = vshrl.u32 %v613, 7
          %v615 = vsub.s32 0, %v614
          %v616 = vrot.slane %v599, %v615
          %618 = vmatprep.subr.mxu0 0.0
          %619 = vmatpush1.msra.mxu0 %v583
          %620 = vmatprep.subr.mxu0 0.0
          %621 = vmatpush1.msra.mxu0 %v584
          %622 = vmatprep.subr.mxu0 0.0
          %623 = vmatpush1.msra.mxu0 %v585
          %624 = vmatprep.subr.mxu0 0.0
          %625 = vmatpush1.msra.mxu0 %v586
          %626 = vmatprep.subr.mxu0 0.0
          %627 = vmatpush1.msra.mxu0 %v587
          %628 = vmatprep.subr.mxu0 0.0
          %629 = vmatpush1.msra.mxu0 %v588
          %630 = vmatprep.subr.mxu0 0.0
          %631 = vmatpush1.msra.mxu0 %v589
          %632 = vmatprep.subr.mxu0 0.0
          %633 = vmatpush1.msra.mxu0 %v590
          %634 = vmatprep.subr.mxu0 0.0
          %635 = vmatpush1.msra.mxu0 %v591
          %636 = vmatprep.subr.mxu0 0.0
          %637 = vmatpush1.msra.mxu0 %v592
          %638 = vmatprep.subr.mxu0 0.0
          %639 = vmatpush1.msra.mxu0 %v593
          %640 = vmatprep.subr.mxu0 0.0
          %641 = vmatpush1.msra.mxu0 %v594
          %642 = vmatprep.subr.mxu0 0.0
          %643 = vmatpush1.msra.mxu0 %v595
          %644 = vmatprep.subr.mxu0 0.0
          %645 = vmatpush1.msra.mxu0 %v596
          %646 = vmatprep.subr.mxu0 0.0
          %647 = vmatpush1.msra.mxu0 %v597
          %648 = vmatprep.subr.mxu0 0.0
          %649 = vmatpush1.msra.mxu0 %v598
          %650 = vmatprep.subr.mxu0 0.0
          %651 = vmatpush1.msra.mxu0 0.0
          %652 = vmatprep.subr.mxu0 0.0
          %653 = vmatpush1.msra.mxu0 0.0
          %654 = vmatprep.subr.mxu0 0.0
          %655 = vmatpush1.msra.mxu0 0.0
          %656 = vmatprep.subr.mxu0 0.0
          %657 = vmatpush1.msra.mxu0 0.0
          %658 = vmatprep.subr.mxu0 0.0
          %659 = vmatpush1.msra.mxu0 0.0
          %660 = vmatprep.subr.mxu0 0.0
          %661 = vmatpush1.msra.mxu0 0.0
          %662 = vmatprep.subr.mxu0 0.0
          %663 = vmatpush1.msra.mxu0 0.0
          %664 = vmatprep.subr.mxu0 0.0
          %665 = vmatpush1.msra.mxu0 0.0
          %666 = vmatprep.subr.mxu0 0.0
          %667 = vmatpush1.msra.mxu0 0.0
          %668 = vmatprep.subr.mxu0 0.0
          %669 = vmatpush1.msra.mxu0 0.0
          %670 = vmatprep.subr.mxu0 0.0
          %671 = vmatpush1.msra.mxu0 0.0
          %672 = vmatprep.subr.mxu0 0.0
          %673 = vmatpush1.msra.mxu0 0.0
          %674 = vmatprep.subr.mxu0 0.0
          %675 = vmatpush1.msra.mxu0 0.0
          %676 = vmatprep.subr.mxu0 0.0
          %677 = vmatpush1.msra.mxu0 0.0
          %678 = vmatprep.subr.mxu0 0.0
          %679 = vmatpush1.msra.mxu0 0.0
          %680 = vmatprep.subr.mxu0 0.0
          %681 = vmatpush1.msra.mxu0 0.0
          %682 = vmatprep.mubr.f32.mxu0 0.0
          %683 = vmatmul.mubr.f32.gmra.mrb[0].mxu0 %v608
          %v684 = vpop.f32.mrb[0].mxu0
          %v685 = vadd.f32 %v616, %v684
          %v686 = vpop.f32.mrb[0].mxu0
          %687 = vdwg.mxu0
          %vm688 = vcmask 254976
          %689 = vst.msk [vmem:[#allocation7] sm:$0x3] %vm688, %v685
          %690 = vmatprep.subr.mxu0 0.0
          %691 = vmatpush1.msra.mxu0 %v583
          %692 = vmatprep.subr.mxu0 0.0
          %693 = vmatpush1.msra.mxu0 %v584
          %694 = vmatprep.subr.mxu0 0.0
          %695 = vmatpush1.msra.mxu0 %v585
          %696 = vmatprep.subr.mxu0 0.0
          %697 = vmatpush1.msra.mxu0 %v586
          %698 = vmatprep.subr.mxu0 0.0
          %699 = vmatpush1.msra.mxu0 %v587
          %700 = vmatprep.subr.mxu0 0.0
          %701 = vmatpush1.msra.mxu0 %v588
          %702 = vmatprep.subr.mxu0 0.0
          %703 = vmatpush1.msra.mxu0 %v589
          %704 = vmatprep.subr.mxu0 0.0
          %705 = vmatpush1.msra.mxu0 %v590
          %706 = vmatprep.subr.mxu0 0.0
          %707 = vmatpush1.msra.mxu0 %v591
          %708 = vmatprep.subr.mxu0 0.0
          %709 = vmatpush1.msra.mxu0 %v592
          %710 = vmatprep.subr.mxu0 0.0
          %711 = vmatpush1.msra.mxu0 %v593
          %712 = vmatprep.subr.mxu0 0.0
          %713 = vmatpush1.msra.mxu0 %v594
          %714 = vmatprep.subr.mxu0 0.0
          %715 = vmatpush1.msra.mxu0 %v595
          %716 = vmatprep.subr.mxu0 0.0
          %717 = vmatpush1.msra.mxu0 %v596
          %718 = vmatprep.subr.mxu0 0.0
          %719 = vmatpush1.msra.mxu0 %v597
          %720 = vmatprep.subr.mxu0 0.0
          %721 = vmatpush1.msra.mxu0 %v598
          %722 = vmatprep.subr.mxu0 0.0
          %723 = vmatpush1.msra.mxu0 0.0
          %724 = vmatprep.subr.mxu0 0.0
          %725 = vmatpush1.msra.mxu0 0.0
          %726 = vmatprep.subr.mxu0 0.0
          %727 = vmatpush1.msra.mxu0 0.0
          %728 = vmatprep.subr.mxu0 0.0
          %729 = vmatpush1.msra.mxu0 0.0
          %730 = vmatprep.subr.mxu0 0.0
          %731 = vmatpush1.msra.mxu0 0.0
          %732 = vmatprep.subr.mxu0 0.0
          %733 = vmatpush1.msra.mxu0 0.0
          %734 = vmatprep.subr.mxu0 0.0
          %735 = vmatpush1.msra.mxu0 0.0
          %736 = vmatprep.subr.mxu0 0.0
          %737 = vmatpush1.msra.mxu0 0.0
          %738 = vmatprep.subr.mxu0 0.0
          %739 = vmatpush1.msra.mxu0 0.0
          %740 = vmatprep.subr.mxu0 0.0
          %741 = vmatpush1.msra.mxu0 0.0
          %742 = vmatprep.subr.mxu0 0.0
          %743 = vmatpush1.msra.mxu0 0.0
          %744 = vmatprep.subr.mxu0 0.0
          %745 = vmatpush1.msra.mxu0 0.0
          %746 = vmatprep.subr.mxu0 0.0
          %747 = vmatpush1.msra.mxu0 0.0
          %748 = vmatprep.subr.mxu0 0.0
          %749 = vmatpush1.msra.mxu0 0.0
          %750 = vmatprep.subr.mxu0 0.0
          %751 = vmatpush1.msra.mxu0 0.0
          %752 = vmatprep.subr.mxu0 0.0
          %753 = vmatpush1.msra.mxu0 0.0
          %754 = vmatprep.mubr.f32.mxu0 0.0
          %755 = vmatmul.mubr.f32.gmra.mrb[0].mxu0 %v611
          %v756 = vpop.f32.mrb[0].mxu0
          %v757 = vadd.f32 %v616, %v756
          %v758 = vpop.f32.mrb[0].mxu0
          %759 = vdwg.mxu0
          %760 = vst.msk [vmem:[#allocation8] sm:$0x3] %vm688, %v757
        $region56: #{tpu_custom_call.1} parent=43 // pred_fallthru
          _
        // Predicated region
        $region57: #{tpu_custom_call.1} parent=43 // pred_check
          %p761 = pneg %p178
        $region58: #{tpu_custom_call.1} parent=43 // pred_check_branch
          %763 = sbr.rel (%p761) target = $region60
        $region59: #{tpu_custom_call.1} parent=43 // pred_region
          %s765 = ssub.s32 32, 32
          %766 = vsyncadd [#allocation6], %s765
          %s768 = sshll.u32 [#allocation7], 4
          %s769 = int_to_ptr.vmem [resolvable:$true] %s768
          %771 = dma.vmem_to_hbm [thread:$0]  %s769, 32, %s6, [#allocation6]
        $region60: #{tpu_custom_call.1} parent=43 // pred_fallthru
          _
        // Predicated region
        $region61: #{tpu_custom_call.1} parent=43 // pred_check
          %p772 = pneg %p199
        $region62: #{tpu_custom_call.1} parent=43 // pred_check_branch
          %774 = sbr.rel (%p772) target = $region64
        $region63: #{tpu_custom_call.1} parent=43 // pred_region
          %s776 = ssub.s32 32, 32
          %777 = vsyncadd [#allocation9], %s776
          %s779 = sshll.u32 [#allocation8], 4
          %s780 = int_to_ptr.vmem [resolvable:$true] %s779
          %782 = dma.vmem_to_hbm [thread:$0]  %s780, 32, %s7, [#allocation9]
        $region64: #{tpu_custom_call.1} parent=43 // pred_fallthru
          _
        // Predicated region
        $region65: #{tpu_custom_call.1} parent=43 // pred_check
          %p783 = pneg %p178
        $region66: #{tpu_custom_call.1} parent=43 // pred_check_branch
          %785 = sbr.rel (%p783) target = $region68
        $region67: #{tpu_custom_call.1} parent=43 // pred_region
          %786 = dma.done [#allocation6], 32
        $region68: #{tpu_custom_call.1} parent=43 // pred_fallthru
          _
        // Predicated region
        $region69: #{tpu_custom_call.1} parent=43 // pred_check
          %p787 = pneg %p199
        $region70: #{tpu_custom_call.1} parent=43 // pred_check_branch
          %789 = sbr.rel (%p787) target = $region72
        $region71: #{tpu_custom_call.1} parent=43 // pred_region
          %790 = dma.done [#allocation9], 32
        $region72: #{tpu_custom_call.1} parent=43 // pred_fallthru
          _
      $region44: #{tpu_custom_call.1} parent=5 // pred_fallthru
        _
      %p791 = scmp.le.s32.totalorder 2, %s19
      // Predicated region
      $region73: #{tpu_custom_call.1} parent=5 // pred_check
        %p792 = pneg %p791
      $region74: #{tpu_custom_call.1} parent=5 // pred_check_branch
        %794 = sbr.rel (%p792) target = $region76
      $region75: #{tpu_custom_call.1} parent=5 // pred_region
        %s795 = ssub.s32 %s19, 2
      $region76: #{tpu_custom_call.1} parent=5 // pred_fallthru
        _
    $region6: #{tpu_custom_call.1} parent=1 // loop_footer
      %s23 = sadd.s32 1, %s19
    $region7: #{tpu_custom_call.1} parent=1 // loop_footer_branch
      %18 = sbr.rel target = $region3
    $region8: #{tpu_custom_call.1} parent=1 // loop_exit
      _
    %796 = vsyncpa [#allocation5], 1
    %s797 = scalar_lea.sflag [#allocation5], 1
    %798 = vsyncpa %s797, 1
    %799 = vsyncpa [#allocation6], 1
    %s800 = scalar_lea.sflag [#allocation6], 1
    %801 = vsyncpa %s800, 1
    %802 = vsyncpa [#allocation9], 1

</llo_original>
